<compile_context>
chip_gen: v6e
topology: v6e:2x2x1
jax: 0.10.0
libtpu: 0.0.40
codegen_flags: <defaults>
</compile_context>

<pallas_src>
import numpy as np
import jax
import jax.numpy as jnp
from jax import lax
from jax.experimental import pallas as pl
from jax.experimental.pallas import tpu as pltpu


def _round_up(x, m):
    return ((x + m - 1) // m) * m


# ----------------------------- Pallas kernel ------------------------------ #
def proj_kernel(w_ref, v_ref, o_ref):
    """All pair-scorer projections as one lane-dense MXU matmul (A @ B^T).

    w_ref (8, D)  bf16: rows 0..3 = folded [La_e, Lb_e, La_t, Lb_t]; rows 4..7 = 0.
    v_ref (bn, D) bf16: candidate embeddings in natural (row, feature) layout;
                        the operand flip happens inside the pipelined kernel
                        (hidden under the DMA) instead of a wrapper transpose pass.
    o_ref (8, bn) f32 : o[r, n] = dot(w[r, :], v[n, :]).
    """
    o_ref[...] = lax.dot_general(
        w_ref[...], v_ref[...],
        dimension_numbers=(((1,), (1,)), ((), ())),
        preferred_element_type=jnp.float32)


# --------------------------- weight pre-folding ---------------------------- #
def fold_conv_linear(conv_w, conv_b, lin_w, lin_b):
    """Fold Conv1d(2,1,k=3,pad=1) + Linear(D,1) into (La, Lb, c0).

    Exact algebra:  score(a, b) = sigmoid(dot(a, La) + dot(b, Lb) + c0)
    with La[d] = w[0,0,0]*L[d+1] + w[0,0,1]*L[d] + w[0,0,2]*L[d-1]   (L OOR = 0)
         Lb[d] = w[0,1,0]*L[d+1] + w[0,1,1]*L[d] + w[0,1,2]*L[d-1]
         c0    = conv_bias * sum(L) + lin_bias
    """
    L = lin_w.reshape(-1).astype(jnp.float32)                 # (D,)
    zero = jnp.zeros((1,), jnp.float32)
    Lp = jnp.concatenate([L[1:], zero])                       # L[d+1]
    Lm = jnp.concatenate([zero, L[:-1]])                      # L[d-1]
    w = conv_w.astype(jnp.float32)
    La = w[0, 0, 0] * Lp + w[0, 0, 1] * L + w[0, 0, 2] * Lm
    Lb = w[0, 1, 0] * Lp + w[0, 1, 1] * L + w[0, 1, 2] * Lm
    c0 = conv_b.astype(jnp.float32)[0] * jnp.sum(L) + lin_b.astype(jnp.float32)[0]
    return La, Lb, c0


# ------------------------------ fused scorer ------------------------------- #
def fused_pair_projections(vtab, wmat, *, bn):
    """One pallas_call projecting every candidate embedding against the four
    folded weight rows.  vtab: (n_pad, D) bf16, wmat: (8, D) bf16 -> (8, n_pad) f32."""
    n_pad, d = vtab.shape
    cost = pl.CostEstimate(
        flops=2 * 8 * d * n_pad,
        transcendentals=0,
        bytes_accessed=n_pad * d * vtab.dtype.itemsize
                       + int(wmat.size) * wmat.dtype.itemsize
                       + 8 * n_pad * 4)
    return pl.pallas_call(
        proj_kernel,
        out_shape=jax.ShapeDtypeStruct((8, n_pad), jnp.float32),
        grid_spec=pltpu.PrefetchScalarGridSpec(
            num_scalar_prefetch=0,
            grid=(n_pad // bn,),
            in_specs=[
                pl.BlockSpec((8, d), lambda i: (0, 0)),      # folded weights (resident)
                pl.BlockSpec((bn, d), lambda i: (i, 0)),     # embedding rows, natural layout
            ],
            out_specs=pl.BlockSpec((8, bn), lambda i: (0, i)),  # lane-dense output
        ),
        compiler_params=pltpu.CompilerParams(
            dimension_semantics=("parallel",)),               # v7x: shard cols across TCs
        cost_estimate=cost,
    )(wmat, vtab)


# ----------------------- device-side Viterbi forward ----------------------- #
def _viterbi_forward(e_scores, qa, qb, c0_t):
    """Viterbi DP as lax.scan; builds one (K,K) sigmoid tile per step and only
    returns (K,) final-layer scores + (T-1,K) backpointers."""
    def step(layer, xs):
        qa_prev, qb_cur, e_cur = xs
        t = jax.nn.sigmoid(qa_prev[:, None] + qb_cur[None, :] + c0_t)   # (K, K)
        temp = layer[:, None] + t                                        # temp[j, c]
        bp = jnp.argmax(temp, axis=0).astype(jnp.int32)                  # (K,)
        new_layer = jnp.max(temp, axis=0) + e_cur
        return new_layer, bp

    last_layer, backptrs = lax.scan(
        step, e_scores[0], (qa[:-1], qb[1:], e_scores[1:]))
    return last_layer, backptrs


# --------------------------- jitted device path ---------------------------- #
def _device_forward(observed_neighbours, params, *, block_n):
    word_embeds = params["word_embeds"]
    tlen, k = observed_neighbours.shape
    d = word_embeds.shape[1]
    n = tlen * k

    # Fold Conv1d+Linear of both scorers into 4 weight rows + 2 scalar biases.
    la_e, lb_e, c0_e = fold_conv_linear(params["emit_w"], params["emit_b"],
                                        params["emit_lw"], params["emit_lb"])
    la_t, lb_t, c0_t = fold_conv_linear(params["trans_w"], params["trans_b"],
                                        params["trans_lw"], params["trans_lb"])
    wmat = jnp.concatenate(
        [jnp.stack([la_e, lb_e, la_t, lb_t]), jnp.zeros((4, d), jnp.float32)],
        axis=0).astype(jnp.bfloat16)                          # (8, D)

    # Column tiling: lane blocks are 128-multiples; prefer >=2 grid steps so
    # ("parallel",) can shard across both v7x TensorCores when the table is big.
    n128 = _round_up(n, 128)
    bn = min(block_n, n128)
    if n128 // bn < 2 and n128 >= 256:
        bn = _round_up(-(-n128 // 2), 128)
    n_pad = _round_up(n128, bn)
    # VMEM/step: 2 buffers * (bn*D*2 + 8*bn*4) bytes ≈ 1 MiB at bn=4096, D=32.

    # Padded gather straight into kernel layout (no transpose / zero-fill pass).
    # Only the T*K unique candidate embeddings are projected; the frame feature
    # (mean of its candidates) is recovered in the epilogue by linearity.
    flat_ids = jnp.pad(observed_neighbours.reshape(-1), (0, n_pad - n))
    vtab = word_embeds[flat_ids].astype(jnp.bfloat16)         # (n_pad, D)

    proj = fused_pair_projections(vtab, wmat, bn=bn)          # (8, n_pad) f32
    row0 = proj[0, :n].reshape(tlen, k)      # dot(cand, La_e)
    row1 = proj[1, :n].reshape(tlen, k)      # dot(cand, Lb_e)
    qa = proj[2, :n].reshape(tlen, k)        # dot(cand, La_t)
    qb = proj[3, :n].reshape(tlen, k)        # dot(cand, Lb_t)

    # Emission: E(feat_i, cand_{i,c}); dot(mean_c cand, La_e) = mean_c dot(cand, La_e).
    pa_e = row0.mean(axis=1) + c0_e
    e_scores = jax.nn.sigmoid(pa_e[:, None] + row1)           # (T, K)

    # Transition tiles sigmoid(qa[i,j] + qb[i+1,c] + c0_t) are built one (K,K)
    # slab at a time inside the Viterbi scan; (T-1,K,K) never hits HBM here.
    last_layer, backptrs = _viterbi_forward(e_scores, qa, qb, c0_t)
    return e_scores, qa, qb, c0_t, last_layer, backptrs


_device_forward_jit = jax.jit(_device_forward, static_argnames=("block_n",))


# --------------------------- pure-JAX reference ---------------------------- #
def pair_score_ref(a, b, conv_w, conv_b, lin_w, lin_b):
    """Unfused f32 reference: Conv1d('same') -> Linear -> sigmoid per pair row."""
    n, d = a.shape
    x = jnp.stack([a, b], axis=1)                       # (N, 2, D)
    xp = jnp.pad(x, ((0, 0), (0, 0), (1, 1)))           # padding=1
    conv = conv_b[0]
    for c in range(2):
        for k in range(3):
            conv = conv + conv_w[0, c, k] * xp[:, c, k:k + d]
    s = conv @ lin_w.reshape(d) + lin_b[0]
    return jax.nn.sigmoid(s)


# --------------------------------- driver ---------------------------------- #
def forward(observed_neighbours, params, *, block_n=4096):
    """BiLSTM_CRF.forward: embedded frame feats -> Viterbi over candidates."""
    obs = jnp.asarray(observed_neighbours)
    e_scores, qa, qb, c0_t, last_layer, backptrs = _device_forward_jit(
        obs, params, block_n=block_n)

    # Tiny host transfer: (K,) final scores + (T-1,K) int32 backpointers.
    last_layer, backptrs = jax.device_get((last_layer, backptrs))
    obs_np = np.asarray(observed_neighbours)
    tlen = obs_np.shape[0]

    # Backtrack mirrors BiLSTM_CRF._viterbi_decode exactly (incl. its pointer quirk).
    layer_id = tlen - 2
    current_ptr = int(np.argmax(last_layer))
    final_path = [int(obs_np[layer_id + 1][current_ptr])]
    while layer_id >= 0:
        final_path.append(int(obs_np[layer_id][current_ptr]))
        current_ptr = int(backptrs[layer_id][current_ptr])
        layer_id -= 1
    score = float(last_layer[int(np.argmax(last_layer))])
    return score, final_path, (e_scores, qa, qb, c0_t)


if __name__ == "__main__":
    # Small deterministic config (matches what forward() implies).
    embedding_dim = 32
    hidden_dim = 32          # unused by the forward hot path (LSTM/GCN branches omitted)
    vocab_size = 32          # graph.number_of_nodes()
    seq_len = 6              # number of observed frames
    n_cand = 4               # candidates per frame

    key = jax.random.PRNGKey(0)
    ks = jax.random.split(key, 10)
    params = {
        "word_embeds": jax.random.normal(ks[0], (vocab_size, embedding_dim), jnp.float32),
        "emit_w":  0.3 * jax.random.normal(ks[1], (1, 2, 3), jnp.float32),   # Conv1d(2,1,3)
        "emit_b":  0.1 * jax.random.normal(ks[2], (1,), jnp.float32),
        "emit_lw": 0.3 * jax.random.normal(ks[3], (1, embedding_dim), jnp.float32),
        "emit_lb": 0.1 * jax.random.normal(ks[4], (1,), jnp.float32),
        "trans_w": 0.3 * jax.random.normal(ks[5], (1, 2, 3), jnp.float32),
        "trans_b": 0.1 * jax.random.normal(ks[6], (1,), jnp.float32),
        "trans_lw": 0.3 * jax.random.normal(ks[7], (1, embedding_dim), jnp.float32),
        "trans_lb": 0.1 * jax.random.normal(ks[8], (1,), jnp.float32),
    }
    observed_neighbours = jax.random.randint(ks[9], (seq_len, n_cand), 0, vocab_size)

    score, tag_seq, (e_scores, qa, qb, c0_t) = forward(observed_neighbours, params)
    jax.block_until_ready(e_scores)

    # ---- test-only sanity check (bf16 inputs -> loosened tolerances) ----
    t_scores = jax.nn.sigmoid(qa[:-1, :, None] + qb[1:, None, :] + c0_t)   # (T-1,K,K)

    cand_emb = params["word_embeds"][observed_neighbours]
    feats = cand_emb.mean(axis=1)
    a_e = jnp.repeat(feats, n_cand, axis=0)
    b_e = cand_emb.reshape(seq_len * n_cand, embedding_dim)
    e_ref = pair_score_ref(a_e, b_e, params["emit_w"], params["emit_b"],
                           params["emit_lw"], params["emit_lb"]).reshape(seq_len, n_cand)
    a_t = jnp.repeat(cand_emb[:-1], n_cand, axis=1).reshape(-1, embedding_dim)
    b_t = jnp.tile(cand_emb[1:], (1, n_cand, 1)).reshape(-1, embedding_dim)
    t_ref = pair_score_ref(a_t, b_t, params["trans_w"], params["trans_b"],
                           params["trans_lw"], params["trans_lb"]
                           ).reshape(seq_len - 1, n_cand, n_cand)
    np.testing.assert_allclose(np.asarray(e_scores), np.asarray(e_ref), rtol=1e-2, atol=1e-2)
    np.testing.assert_allclose(np.asarray(t_scores), np.asarray(t_ref), rtol=1e-2, atol=1e-2)

    assert len(tag_seq) == seq_len
    assert np.isfinite(score)
    print("KERNEL_OK")
</pallas_src>

<mosaic_0001>
module attributes {stable_mosaic.version = 11 : i64} {
  func.func @proj_kernel(%arg0: i32, %arg1: memref<8x32xbf16, #tpu.memory_space<vmem>>, %arg2: memref<128x32xbf16, #tpu.memory_space<vmem>>, %arg3: memref<8x128xf32, #tpu.memory_space<vmem>>) attributes {dimension_semantics = [#tpu.dimension_semantics<parallel>], iteration_bounds = array<i64: 1>, scalar_prefetch = 0 : i64, scratch_operands = 0 : i64, tpu.core_type = #tpu.core_type<tc>, window_params = [{pipeline_mode = #tpu.pipeline_mode<synchronous>, transform_indices = @transform_0, window_bounds = array<i64: 8, 32>}, {transform_indices = @transform_1, window_bounds = array<i64: 128, 32>}, {transform_indices = @transform_2, window_bounds = array<i64: 8, 128>}]} {
    %c0 = arith.constant 0 : index
    %c0_0 = arith.constant 0 : index
    %0 = vector.load %arg1[%c0, %c0_0] : memref<8x32xbf16, #tpu.memory_space<vmem>>, vector<8x32xbf16>
    %c0_1 = arith.constant 0 : index
    %c0_2 = arith.constant 0 : index
    %1 = vector.load %arg2[%c0_1, %c0_2] : memref<128x32xbf16, #tpu.memory_space<vmem>>, vector<128x32xbf16>
    %cst = arith.constant dense<0.000000e+00> : vector<8x128xf32>
    %2 = tpu.matmul %0, %1, %cst {dimension_numbers = #tpu.dot_dimension_numbers<[1], [1], [0], [0], [0, 0, 1, 0], [], []>} : vector<8x32xbf16>, vector<128x32xbf16>, vector<8x128xf32> -> vector<8x128xf32>
    %c0_3 = arith.constant 0 : index
    %c0_4 = arith.constant 0 : index
    %3 = vector.load %arg3[%c0_3, %c0_4] : memref<8x128xf32, #tpu.memory_space<vmem>>, vector<8x128xf32>
    tpu.vector_store %arg3[%c0_3, %c0_4], %2 {strides = array<i32>} : memref<8x128xf32, #tpu.memory_space<vmem>>, vector<8x128xf32>,
    return
  }
  func.func @transform_0(%arg0: i32) -> (i32, i32) {
    %c0_i32 = arith.constant 0 : i32
    %c0_i32_0 = arith.constant 0 : i32
    %c0_i32_1 = arith.constant 0 : i32
    return %c0_i32, %c0_i32_0 : i32, i32
  }
  func.func @transform_1(%arg0: i32) -> (i32, i32) {
    %c0_i32 = arith.constant 0 : i32
    %c0_i32_0 = arith.constant 0 : i32
    return %arg0, %c0_i32 : i32, i32
  }
  func.func @transform_2(%arg0: i32) -> (i32, i32) {
    %c0_i32 = arith.constant 0 : i32
    %c0_i32_0 = arith.constant 0 : i32
    return %c0_i32, %arg0 : i32, i32
  }
}

</mosaic_0001>

<llo_original>
// kernel: squeeze.43
$region0: #{squeeze.43}
  %s0 = inlined_call_operand.vmem [shape: f32[24], index: 0, kind: input, shape index: {}]
  %s1 = inlined_call_operand.vmem [shape: f32[6,4], index: 1, kind: output, shape index: {}]
  $region1: #{squeeze.43} parent=0
    #allocation0 [shape = 'u8[4096]{0}', space=vmem, size = 0x1000, scoped, tag = 'scoped mem for input reshape']
    %s3 = sshll.u32 1, 1
    %s4 = ssub.s32 %s3, 1
    %v5 = vld [vmem:[%s0] sm:%s4]
    %6 = vst [vmem:[#allocation0] sm:%s4] %v5
    %v7 = vld [vmem:[#allocation0] sm:$0x1]
    %vm8 = vcmask 31744
    %9 = vst.msk [vmem:[%s1] sm:$0x1] %vm8, %v7
    %v10 = vld [vmem:[#allocation0] sm:$0x1]
    %11 = vrot.lane.b32.xlu0 %v10, 124
    %v12 = vpop.permute.xlu0 %11
    %vm13 = vcmask 31744
    %s14 = scalar_lea.vmem %s1, 1
    %15 = vst.msk [vmem:[%s14] sm:$0x1] %vm13, %v12
    %v16 = vld [vmem:[#allocation0] sm:$0x1]
    %17 = vrot.lane.b32.xlu0 %v16, 120
    %v18 = vpop.permute.xlu0 %17
    %vm19 = vcmask 31744
    %s20 = scalar_lea.vmem %s1, 2
    %21 = vst.msk [vmem:[%s20] sm:$0x1] %vm19, %v18
    %v22 = vld [vmem:[#allocation0] sm:$0x1]
    %23 = vrot.lane.b32.xlu0 %v22, 116
    %v24 = vpop.permute.xlu0 %23
    %vm25 = vcmask 31744
    %s26 = scalar_lea.vmem %s1, 3
    %27 = vst.msk [vmem:[%s26] sm:$0x1] %vm25, %v24
    %v28 = vld [vmem:[#allocation0] sm:$0x1]
    %29 = vrot.lane.b32.xlu0 %v28, 112
    %v30 = vpop.permute.xlu0 %29
    %vm31 = vcmask 31744
    %s32 = scalar_lea.vmem %s1, 4
    %33 = vst.msk [vmem:[%s32] sm:$0x1] %vm31, %v30
    %v34 = vld [vmem:[#allocation0] sm:$0x1]
    %35 = vrot.lane.b32.xlu0 %v34, 108
    %v36 = vpop.permute.xlu0 %35
    %vm37 = vcmask 31744
    %s38 = scalar_lea.vmem %s1, 5
    %39 = vst.msk [vmem:[%s38] sm:$0x1] %vm37, %v36

// kernel: custom-call.2
$region0: #{custom-call.2}
  %s0 = inlined_call_operand.vmem [shape: s32[5,4], index: 0, kind: output, shape index: {}]

// kernel: _device_forward.1
$region0: #{_device_forward.1}
  #allocation0 [shape = 'u32[]', space=smem, size = 0x4, offset = 0x4, fixed_abs, tag = 'smem constant byte address 0x4 - core index']
  #allocation1 [shape = 'u32[144,128]{1,0:T(1,128)}', space=vmem, size = 0x12000, scoped, tag = 'internal scratch']
  %s0 = inlined_call_operand.vmem [shape: bf16[8,32], index: 0, kind: input, shape index: {}]
  %s1 = inlined_call_operand.vmem [shape: bf16[128,32], index: 1, kind: input, shape index: {}]
  %s2 = inlined_call_operand.vmem [shape: f32[8,128], index: 2, kind: output, shape index: {}]
  %s3 = sld [smem:[#allocation0]]
  $region18: #{_device_forward.1} parent=0
    _
  %s5 = ssub.s32 1, %s3
  %s6 = scalar_select 0, %s5, %s3
  // Predicated region
  $region2: #{_device_forward.1} parent=0 // pred_check
    _
  $region3: #{_device_forward.1} parent=0 // pred_check_branch
    %8 = sbr.rel (0) target = $region5
  $region4: #{_device_forward.1} parent=0 // pred_region
    _
  $region5: #{_device_forward.1} parent=0 // pred_fallthru
    _
  // Predicated region
  $region6: #{_device_forward.1} parent=0 // pred_check
    _
  $region7: #{_device_forward.1} parent=0 // pred_check_branch
    %10 = sbr.rel (0) target = $region9
  $region8: #{_device_forward.1} parent=0 // pred_region
    _
  $region9: #{_device_forward.1} parent=0 // pred_fallthru
    _
  %v12 = vld [vmem:[%s0] sm:$0xf]
  %v13 = vld [vmem:[%s1] sm:$0xf]
  %v14 = vld [vmem:[%s1 + $0x4] sm:$0xf]
  %v15 = vld [vmem:[%s1 + $0x8] sm:$0xf]
  %v16 = vld [vmem:[%s1 + $0xc] sm:$0xf]
  %v17 = vld [vmem:[%s1 + $0x10] sm:$0xf]
  %v18 = vld [vmem:[%s1 + $0x14] sm:$0xf]
  %v19 = vld [vmem:[%s1 + $0x18] sm:$0xf]
  %v20 = vld [vmem:[%s1 + $0x1c] sm:$0xf]
  %v21 = vld [vmem:[%s1 + $0x20] sm:$0xf]
  %v22 = vld [vmem:[%s1 + $0x24] sm:$0xf]
  %v23 = vld [vmem:[%s1 + $0x28] sm:$0xf]
  %v24 = vld [vmem:[%s1 + $0x2c] sm:$0xf]
  %v25 = vld [vmem:[%s1 + $0x30] sm:$0xf]
  %v26 = vld [vmem:[%s1 + $0x34] sm:$0xf]
  %v27 = vld [vmem:[%s1 + $0x38] sm:$0xf]
  %v28 = vld [vmem:[%s1 + $0x3c] sm:$0xf]
  %v45 = vunpack.c.l.b16 %v13
  %v46 = vunpack.c.l.b16 %v14
  %v47 = vunpack.c.l.b16 %v15
  %v48 = vunpack.c.l.b16 %v16
  %v49 = vunpack.c.l.b16 %v17
  %v50 = vunpack.c.l.b16 %v18
  %v51 = vunpack.c.l.b16 %v19
  %v52 = vunpack.c.l.b16 %v20
  %v53 = vunpack.c.l.b16 %v21
  %v54 = vunpack.c.l.b16 %v22
  %v55 = vunpack.c.l.b16 %v23
  %v56 = vunpack.c.l.b16 %v24
  %v57 = vunpack.c.l.b16 %v25
  %v58 = vunpack.c.l.b16 %v26
  %v59 = vunpack.c.l.b16 %v27
  %v60 = vunpack.c.l.b16 %v28
  %v61 = vpack.c.b16 %v46, %v45
  %v62 = vpack.c.b16 %v48, %v47
  %v63 = vpack.c.b16 %v50, %v49
  %v64 = vpack.c.b16 %v52, %v51
  %v65 = vpack.c.b16 %v54, %v53
  %v66 = vpack.c.b16 %v56, %v55
  %v67 = vpack.c.b16 %v58, %v57
  %v68 = vpack.c.b16 %v60, %v59
  %vm69 = vcmask 261120
  %v71 = vsel %vm69, %v12, 0
  %v74 = vsel %vm69, %v61, 0
  %v77 = vsel %vm69, %v62, 0
  %v80 = vsel %vm69, %v63, 0
  %v83 = vsel %vm69, %v64, 0
  %v86 = vsel %vm69, %v65, 0
  %v89 = vsel %vm69, %v66, 0
  %v92 = vsel %vm69, %v67, 0
  %v95 = vsel %vm69, %v68, 0
  %97 = vmatprep.subr.bf16.mxu0 0
  %98 = vmatpush1.bf16.xpose.msra.mxu0 %v95
  %99 = vmatprep.subr.bf16.mxu0 0
  %100 = vmatpush1.bf16.xpose.msra.mxu0 %v92
  %101 = vmatprep.subr.bf16.mxu0 0
  %102 = vmatpush1.bf16.xpose.msra.mxu0 %v89
  %103 = vmatprep.subr.bf16.mxu0 0
  %104 = vmatpush1.bf16.xpose.msra.mxu0 %v86
  %105 = vmatprep.subr.bf16.mxu0 0
  %106 = vmatpush1.bf16.xpose.msra.mxu0 %v83
  %107 = vmatprep.subr.bf16.mxu0 0
  %108 = vmatpush1.bf16.xpose.msra.mxu0 %v80
  %109 = vmatprep.subr.bf16.mxu0 0
  %110 = vmatpush1.bf16.xpose.msra.mxu0 %v77
  %111 = vmatprep.subr.bf16.mxu0 0
  %112 = vmatpush1.bf16.xpose.msra.mxu0 %v74
  %113 = vmatprep.subr.bf16.mxu0 0
  %114 = vmatpush2.bf16.xpose.msra.mxu0 0
  %115 = vmatprep.subr.bf16.mxu0 0
  %116 = vmatpush2.bf16.xpose.msra.mxu0 0
  %117 = vmatprep.subr.bf16.mxu0 0
  %118 = vmatpush2.bf16.xpose.msra.mxu0 0
  %119 = vmatprep.subr.bf16.mxu0 0
  %120 = vmatpush2.bf16.xpose.msra.mxu0 0
  %121 = vmatprep.subr.bf16.mxu0 0
  %122 = vmatpush2.bf16.xpose.msra.mxu0 0
  %123 = vmatprep.subr.bf16.mxu0 0
  %124 = vmatpush2.bf16.xpose.msra.mxu0 0
  %125 = vmatprep.subr.bf16.mxu0 0
  %126 = vmatpush2.bf16.xpose.msra.mxu0 0
  %127 = vmatprep.subr.bf16.mxu0 0
  %128 = vmatpush2.bf16.xpose.msra.mxu0 0
  %129 = vmatprep.mubr.bf16.mxu0 0
  %130 = vmatmul.mubr.bf16.gmra.mxu0 %v71
  %v131 = vpop.f32.mrf.mxu0
  %v132 = vadd.f32 0.0, %v131
  %v133 = vpop.f32.mrf.mxu0
  %v134 = vpop.f32.mrf.mxu0
  %v135 = vpop.f32.mrf.mxu0
  %136 = vdwg.mxu0
  %137 = vst [vmem:[%s2] sm:$0xff] %v132
  // Predicated region
  $region10: #{_device_forward.1} parent=0 // pred_check
    _
  $region11: #{_device_forward.1} parent=0 // pred_check_branch
    %139 = sbr.rel (0) target = $region13
  $region12: #{_device_forward.1} parent=0 // pred_region
    _
  $region13: #{_device_forward.1} parent=0 // pred_fallthru
    _
  // Predicated region
  $region14: #{_device_forward.1} parent=0 // pred_check
    _
  $region15: #{_device_forward.1} parent=0 // pred_check_branch
    %141 = sbr.rel (0) target = $region17
  $region16: #{_device_forward.1} parent=0 // pred_region
    _
  $region17: #{_device_forward.1} parent=0 // pred_fallthru
    _

</llo_original>
